<compile_context>
chip_gen: v5e
topology: v5e:2x2
jax: 0.10.0
libtpu: 0.0.40
codegen_flags: <defaults>
</compile_context>

<pallas_src>
import jax
import jax.numpy as jnp
from jax.experimental import pallas as pl
from jax.experimental.pallas import tpu as pltpu


def film_kernel(g_ref, b_ref, x_ref, o_ref):
    """One grid step = one (batch, spatial-tile) block.

    g_ref : (1, C, 1)        gamma for this batch element
    b_ref : (1, C, 1)        beta for this batch element
    x_ref : (1, C, HW_TILE)  current tile of x
    o_ref : (1, C, HW_TILE)  output tile
    """
    o_ref[...] = (g_ref[...] * x_ref[...] + b_ref[...]).astype(o_ref.dtype)


def _pick_hw_tile(hw, channels, itemsize, target_bytes=2 * 1024 * 1024):
    """Lane-aligned spatial tile, ~target_bytes per x block, capped at HW."""
    if hw % 128 != 0:
        # Not lane-aligned: take the full (untiled) spatial axis so the block
        # equals the array dim and stores stay as dense as possible.
        return hw
    target = (target_bytes // max(1, channels * itemsize)) // 128 * 128
    target = max(128, target)
    return min(hw, target)


def film_forward(x, t_emb, weight, bias):
    """x: (B, C, H, W), t_emb: (B, T), weight: (2C, T), bias: (2C,)."""
    B, C, H, W = x.shape
    HW = H * W

    # --- Linear in plain XLA (microscopic) -------------------------------
    gamma_beta = (t_emb @ weight.T + bias)            # (B, 2C), f32
    gamma = gamma_beta[:, :C].astype(x.dtype).reshape(B, C, 1)
    beta = gamma_beta[:, C:].astype(x.dtype).reshape(B, C, 1)

    # --- Pallas elementwise FiLM over lane-dense spatial tiles -----------
    x3 = x.reshape(B, C, HW)
    hw_tile = _pick_hw_tile(HW, C, jnp.dtype(x.dtype).itemsize)
    grid = (B, pl.cdiv(HW, hw_tile))

    out = pl.pallas_call(
        film_kernel,
        out_shape=jax.ShapeDtypeStruct((B, C, HW), x.dtype),
        grid=grid,
        in_specs=[
            pl.BlockSpec((1, C, 1), lambda b, s: (b, 0, 0)),        # gamma
            pl.BlockSpec((1, C, 1), lambda b, s: (b, 0, 0)),        # beta
            pl.BlockSpec((1, C, hw_tile), lambda b, s: (b, 0, s)),  # x tile
        ],
        out_specs=pl.BlockSpec((1, C, hw_tile), lambda b, s: (b, 0, s)),
        compiler_params=pltpu.CompilerParams(
            dimension_semantics=("parallel", "parallel")
        ),
    )(gamma, beta, x3)

    return out.reshape(B, C, H, W)


def film_reference(x, t_emb, weight, bias):
    gamma_beta = t_emb @ weight.T + bias          # (B, 2C)
    C = x.shape[1]
    gamma = gamma_beta[:, :C][:, :, None, None]
    beta = gamma_beta[:, C:][:, :, None, None]
    return gamma * x + beta


if __name__ == "__main__":
    B, C, H, W = 2, 4, 16, 16
    time_dim = 8

    key = jax.random.PRNGKey(0)
    kx, kt, kw, kb = jax.random.split(key, 4)

    x = jax.random.normal(kx, (B, C, H, W), dtype=jnp.float32)
    t_emb = jax.random.normal(kt, (B, time_dim), dtype=jnp.float32)

    # Deterministic nn.Linear-style init: U(-1/sqrt(fan_in), 1/sqrt(fan_in))
    bound = 1.0 / (time_dim ** 0.5)
    weight = jax.random.uniform(
        kw, (2 * C, time_dim), dtype=jnp.float32, minval=-bound, maxval=bound
    )
    bias = jax.random.uniform(
        kb, (2 * C,), dtype=jnp.float32, minval=-bound, maxval=bound
    )

    out = film_forward(x, t_emb, weight, bias)
    out = jax.block_until_ready(out)

    ref = film_reference(x, t_emb, weight, bias)
    assert out.shape == (B, C, H, W)
    assert jnp.allclose(out, ref, atol=1e-5, rtol=1e-5), "mismatch vs reference"

    print("KERNEL_OK")
</pallas_src>

<mosaic_0001>
module attributes {stable_mosaic.version = 11 : i64} {
  func.func @film_kernel(%arg0: i32, %arg1: i32, %arg2: memref<1x4x1xf32, #tpu.memory_space<vmem>>, %arg3: memref<1x4x1xf32, #tpu.memory_space<vmem>>, %arg4: memref<1x4x256xf32, #tpu.memory_space<vmem>>, %arg5: memref<1x4x256xf32, #tpu.memory_space<vmem>>) attributes {dimension_semantics = [#tpu.dimension_semantics<parallel>, #tpu.dimension_semantics<parallel>], iteration_bounds = array<i64: 2, 1>, scalar_prefetch = 0 : i64, scratch_operands = 0 : i64, tpu.core_type = #tpu.core_type<tc>, window_params = [{transform_indices = @transform_0, window_bounds = array<i64: 1, 4, 1>}, {transform_indices = @transform_1, window_bounds = array<i64: 1, 4, 1>}, {transform_indices = @transform_2, window_bounds = array<i64: 1, 4, 256>}, {transform_indices = @transform_3, window_bounds = array<i64: 1, 4, 256>}]} {
    %c0 = arith.constant 0 : index
    %c0_0 = arith.constant 0 : index
    %c0_1 = arith.constant 0 : index
    %0 = vector.load %arg2[%c0, %c0_0, %c0_1] : memref<1x4x1xf32, #tpu.memory_space<vmem>>, vector<1x4x1xf32>
    %c0_2 = arith.constant 0 : index
    %c0_3 = arith.constant 0 : index
    %c0_4 = arith.constant 0 : index
    %1 = vector.load %arg4[%c0_2, %c0_3, %c0_4] : memref<1x4x256xf32, #tpu.memory_space<vmem>>, vector<1x4x256xf32>
    %2 = vector.broadcast %0 : vector<1x4x1xf32> to vector<1x4x256xf32>
    %3 = arith.mulf %2, %1 : vector<1x4x256xf32>
    %c0_5 = arith.constant 0 : index
    %c0_6 = arith.constant 0 : index
    %c0_7 = arith.constant 0 : index
    %4 = vector.load %arg3[%c0_5, %c0_6, %c0_7] : memref<1x4x1xf32, #tpu.memory_space<vmem>>, vector<1x4x1xf32>
    %5 = vector.broadcast %4 : vector<1x4x1xf32> to vector<1x4x256xf32>
    %6 = arith.addf %3, %5 : vector<1x4x256xf32>
    %c0_8 = arith.constant 0 : index
    %c0_9 = arith.constant 0 : index
    %c0_10 = arith.constant 0 : index
    %7 = vector.load %arg5[%c0_8, %c0_9, %c0_10] : memref<1x4x256xf32, #tpu.memory_space<vmem>>, vector<1x4x256xf32>
    tpu.vector_store %arg5[%c0_8, %c0_9, %c0_10], %6 {strides = array<i32>} : memref<1x4x256xf32, #tpu.memory_space<vmem>>, vector<1x4x256xf32>,
    return
  }
  func.func @transform_0(%arg0: i32, %arg1: i32) -> (i32, i32, i32) {
    %c0_i32 = arith.constant 0 : i32
    %c0_i32_0 = arith.constant 0 : i32
    %c0_i32_1 = arith.constant 0 : i32
    return %arg0, %c0_i32, %c0_i32_0 : i32, i32, i32
  }
  func.func @transform_1(%arg0: i32, %arg1: i32) -> (i32, i32, i32) {
    %c0_i32 = arith.constant 0 : i32
    %c0_i32_0 = arith.constant 0 : i32
    %c0_i32_1 = arith.constant 0 : i32
    return %arg0, %c0_i32, %c0_i32_0 : i32, i32, i32
  }
  func.func @transform_2(%arg0: i32, %arg1: i32) -> (i32, i32, i32) {
    %c0_i32 = arith.constant 0 : i32
    %c0_i32_0 = arith.constant 0 : i32
    return %arg0, %c0_i32, %arg1 : i32, i32, i32
  }
  func.func @transform_3(%arg0: i32, %arg1: i32) -> (i32, i32, i32) {
    %c0_i32 = arith.constant 0 : i32
    %c0_i32_0 = arith.constant 0 : i32
    return %arg0, %c0_i32, %arg1 : i32, i32, i32
  }
}

</mosaic_0001>

<llo_original>
// kernel: tpu_custom_call.1
$region0: #{tpu_custom_call.1}
  #allocation0 [shape = 'u32[]', space=smem, size = 0x4, offset = 0x4, fixed_abs, tag = 'smem constant byte address 0x4 - core index']
  #allocation1 [shape = 'u32[72,128]{1,0:T(1,128)}', space=vmem, size = 0x9000, scoped, tag = 'internal scratch']
  %s0 = inlined_call_operand.vmem [shape: f32[2,4,1], index: 0, kind: input, shape index: {}]
  %s1 = inlined_call_operand.vmem [shape: f32[2,4,1], index: 1, kind: input, shape index: {}]
  %s2 = inlined_call_operand.vmem [shape: f32[2,4,256], index: 2, kind: input, shape index: {}]
  %s3 = inlined_call_operand.hbm [shape: f32[2,4,256], index: 3, kind: output, shape index: {}]
  %s4 = sld [smem:[#allocation0]]
  $region45: #{tpu_custom_call.1} parent=0
    _
  %s6 = ssub.s32 1, %s4
  %s7 = scalar_select 0, %s6, %s4
  $region1: #{tpu_custom_call.1} parent=0
    #allocation2 [shape = 'u8[8192]{0}', space=vmem, size = 0x2000, scoped, tag = 'output window, operand 0']
    #allocation3 [shape = 's32[2]{0}', space=sflag, size = 0x8, scoped, tag = 'scoped memory for tpu_custom_call.1']
    %8 = vsyncpa [#allocation3], 0
    %s9 = scalar_lea.sflag [#allocation3], 1
    %10 = vsyncpa %s9, 0
    loop: start=0, step=1, limit=4
    $region2: #{tpu_custom_call.1} parent=1 // loop_pre_header
      _
    $region3: #{tpu_custom_call.1} parent=1 // loop_header
      %s12 = sphi 0, %s16
      %p13 = scmp.ge.s32.totalorder %s12, 4
      %s19 = sphi 0, %s31
      %s20 = sphi 0, %s27
      %s21 = sphi 0, %s19
      %s22 = sphi 0, %s20
      %s23 = sphi 0, %s21
      %s24 = sphi 0, %s22
      %s34 = sphi 0, %s36
      %s37 = sphi 0, %s34
      %s38 = sphi 0, %s37
      %s54 = sphi 0, %s38
      %s60 = sphi 0, %s62
      %s63 = sphi 0, %s60
      %s64 = sphi 0, %s63
      %s80 = sphi 0, %s64
      %s88 = sphi 0, %s90
      %s91 = sphi 0, %s88
      %s92 = sphi 0, %s91
      %s108 = sphi 0, %s92
      %s116 = sphi 0, %s118
      %s119 = sphi 0, %s116
      %s120 = sphi 0, %s119
      %s136 = sphi 0, %s120
    $region4: #{tpu_custom_call.1} parent=1 // loop_header_branch
      %15 = sbr.rel (%p13) target = $region8
    $region5: #{tpu_custom_call.1} parent=1 // loop_body
      %s17 = ssub.s32 %s12, 1
      %s18 = ssub.s32 %s12, 2
      %s25 = sadd.s32 1, %s20
      %p26 = scmp.ge.s32.totalorder %s25, 1
      %s27 = scalar_select %p26, 0, %s25
      %s28 = sadd.s32 1, %s19
      %s29 = scalar_select %p26, %s28, %s19
      %p30 = scmp.ge.s32.totalorder %s29, 2
      %s31 = scalar_select %p30, 0, %s29
      %s32 = ssub.s32 %s19, %s31
      %p33 = scmp.eq.s32.totalorder %s32, 0
      %s35 = sadd.s32 %s34, 1
      %s36 = scalar_select %p33, %s34, %s35
      %p39 = pneg %p33
      %p40 = scmp.eq.s32.totalorder %s12, 1
      %p41 = por %p39, %p40
      %p42 = scmp.ne.s32.totalorder %s34, %s37
      %p43 = scmp.eq.s32.totalorder %s12, 0
      %p44 = por %p42, %p43
      %p45 = scmp.ne.s32.totalorder %s34, %s37
      %p46 = scmp.eq.s32.totalorder %s17, 1
      %p47 = por %p45, %p46
      %p48 = scmp.ne.s32.totalorder %s37, %s38
      %p49 = scmp.eq.s32.totalorder %s17, 0
      %p50 = por %p48, %p49
      %p51 = scmp.ne.s32.totalorder %s37, %s38
      %p52 = scmp.eq.s32.totalorder %s18, 1
      %p53 = por %p51, %p52
      %p55 = scmp.ne.s32.totalorder %s38, %s54
      %p56 = scmp.eq.s32.totalorder %s18, 0
      %p57 = por %p55, %p56
      %s58 = ssub.s32 %s19, %s31
      %p59 = scmp.eq.s32.totalorder %s58, 0
      %s61 = sadd.s32 %s60, 1
      %s62 = scalar_select %p59, %s60, %s61
      %p65 = pneg %p59
      %p66 = scmp.eq.s32.totalorder %s12, 1
      %p67 = por %p65, %p66
      %p68 = scmp.ne.s32.totalorder %s60, %s63
      %p69 = scmp.eq.s32.totalorder %s12, 0
      %p70 = por %p68, %p69
      %p71 = scmp.ne.s32.totalorder %s60, %s63
      %p72 = scmp.eq.s32.totalorder %s17, 1
      %p73 = por %p71, %p72
      %p74 = scmp.ne.s32.totalorder %s63, %s64
      %p75 = scmp.eq.s32.totalorder %s17, 0
      %p76 = por %p74, %p75
      %p77 = scmp.ne.s32.totalorder %s63, %s64
      %p78 = scmp.eq.s32.totalorder %s18, 1
      %p79 = por %p77, %p78
      %p81 = scmp.ne.s32.totalorder %s64, %s80
      %p82 = scmp.eq.s32.totalorder %s18, 0
      %p83 = por %p81, %p82
      %s84 = ssub.s32 %s19, %s31
      %s85 = ssub.s32 %s20, %s27
      %s86 = sor.u32 %s84, %s85
      %p87 = scmp.eq.s32.totalorder %s86, 0
      %s89 = sadd.s32 %s88, 1
      %s90 = scalar_select %p87, %s88, %s89
      %p93 = pneg %p87
      %p94 = scmp.eq.s32.totalorder %s12, 1
      %p95 = por %p93, %p94
      %p96 = scmp.ne.s32.totalorder %s88, %s91
      %p97 = scmp.eq.s32.totalorder %s12, 0
      %p98 = por %p96, %p97
      %p99 = scmp.ne.s32.totalorder %s88, %s91
      %p100 = scmp.eq.s32.totalorder %s17, 1
      %p101 = por %p99, %p100
      %p102 = scmp.ne.s32.totalorder %s91, %s92
      %p103 = scmp.eq.s32.totalorder %s17, 0
      %p104 = por %p102, %p103
      %p105 = scmp.ne.s32.totalorder %s91, %s92
      %p106 = scmp.eq.s32.totalorder %s18, 1
      %p107 = por %p105, %p106
      %p109 = scmp.ne.s32.totalorder %s92, %s108
      %p110 = scmp.eq.s32.totalorder %s18, 0
      %p111 = por %p109, %p110
      %s112 = ssub.s32 %s19, %s31
      %s113 = ssub.s32 %s20, %s27
      %s114 = sor.u32 %s112, %s113
      %p115 = scmp.eq.s32.totalorder %s114, 0
      %s117 = sadd.s32 %s116, 1
      %s118 = scalar_select %p115, %s116, %s117
      %p121 = pneg %p115
      %p122 = scmp.eq.s32.totalorder %s12, 1
      %p123 = por %p121, %p122
      %p124 = scmp.ne.s32.totalorder %s116, %s119
      %p125 = scmp.eq.s32.totalorder %s12, 0
      %p126 = por %p124, %p125
      %p127 = scmp.ne.s32.totalorder %s116, %s119
      %p128 = scmp.eq.s32.totalorder %s17, 1
      %p129 = por %p127, %p128
      %p130 = scmp.ne.s32.totalorder %s119, %s120
      %p131 = scmp.eq.s32.totalorder %s17, 0
      %p132 = por %p130, %p131
      %p133 = scmp.ne.s32.totalorder %s119, %s120
      %p134 = scmp.eq.s32.totalorder %s18, 1
      %p135 = por %p133, %p134
      %p137 = scmp.ne.s32.totalorder %s120, %s136
      %p138 = scmp.eq.s32.totalorder %s18, 0
      %p139 = por %p137, %p138
      %p140 = scmp.le.s32.totalorder 1, %s12
      %p141 = scmp.lt.s32.totalorder %s12, 3
      %p142 = pnand %p140, %p141
      %p143 = pneg %p142
      // Predicated region
      $region9: #{tpu_custom_call.1} parent=5 // pred_check
        _
      $region10: #{tpu_custom_call.1} parent=5 // pred_check_branch
        %145 = sbr.rel (%p142) target = $region12
      $region11: #{tpu_custom_call.1} parent=5 // pred_region
        %s146 = ssub.s32 %s12, 1
      $region12: #{tpu_custom_call.1} parent=5 // pred_fallthru
        _
      %p147 = scmp.lt.s32.totalorder %s12, 2
      // Predicated region
      $region13: #{tpu_custom_call.1} parent=5 // pred_check
        %p148 = pneg %p147
      $region14: #{tpu_custom_call.1} parent=5 // pred_check_branch
        %150 = sbr.rel (%p148) target = $region16
      $region15: #{tpu_custom_call.1} parent=5 // pred_region
        // Predicated region
        $region17: #{tpu_custom_call.1} parent=15 // pred_check
          %p151 = pneg %p44
        $region18: #{tpu_custom_call.1} parent=15 // pred_check_branch
          %153 = sbr.rel (%p151) target = $region20
        $region19: #{tpu_custom_call.1} parent=15 // pred_region
          %p154 = scmp.lt.s32.totalorder %s19, 1
          %s155 = scalar_select %p154, %s19, 1
          %s156 = smul.addr %s155, 4
          %s157 = scalar_lea.vmem %s0, %s156
        $region20: #{tpu_custom_call.1} parent=15 // pred_fallthru
          _
        // Predicated region
        $region21: #{tpu_custom_call.1} parent=15 // pred_check
          %p158 = pneg %p70
        $region22: #{tpu_custom_call.1} parent=15 // pred_check_branch
          %160 = sbr.rel (%p158) target = $region24
        $region23: #{tpu_custom_call.1} parent=15 // pred_region
          %p161 = scmp.lt.s32.totalorder %s19, 1
          %s162 = scalar_select %p161, %s19, 1
          %s163 = smul.addr %s162, 4
          %s164 = scalar_lea.vmem %s1, %s163
        $region24: #{tpu_custom_call.1} parent=15 // pred_fallthru
          _
        // Predicated region
        $region25: #{tpu_custom_call.1} parent=15 // pred_check
          %p165 = pneg %p98
        $region26: #{tpu_custom_call.1} parent=15 // pred_check_branch
          %167 = sbr.rel (%p165) target = $region28
        $region27: #{tpu_custom_call.1} parent=15 // pred_region
          %s168 = smul.u32 2, %s20
          %p169 = scmp.lt.s32.totalorder %s19, 1
          %s170 = scalar_select %p169, %s19, 1
          %p171 = scmp.lt.s32.totalorder %s168, 1
          %s172 = scalar_select %p171, %s168, 1
          %s173 = smul.addr %s170, 2
          %s174 = sadd.s32 %s172, %s173
          %s175 = smul.addr %s174, 4
          %s176 = scalar_lea.vmem %s2, %s175
          %s177 = smul.u32 2, %s20
        $region28: #{tpu_custom_call.1} parent=15 // pred_fallthru
          _
      $region16: #{tpu_custom_call.1} parent=5 // pred_fallthru
        _
      %p178 = scmp.le.s32.totalorder 1, %s12
      %p179 = scmp.lt.s32.totalorder %s12, 3
      %p180 = pnand %p178, %p179
      %p181 = pneg %p180
      // Predicated region
      $region29: #{tpu_custom_call.1} parent=5 // pred_check
        _
      $region30: #{tpu_custom_call.1} parent=5 // pred_check_branch
        %183 = sbr.rel (%p180) target = $region32
      $region31: #{tpu_custom_call.1} parent=5 // pred_region
        %s184 = ssub.s32 %s12, 1
        %p185 = scmp.lt.s32.totalorder %s21, 1
        %s186 = scalar_select %p185, %s21, 1
        %s187 = smul.addr %s186, 4
        %s188 = scalar_lea.vmem %s0, %s187
        %p189 = pneg %p50
        %p190 = pneg %p47
        %p191 = scmp.lt.s32.totalorder %s21, 1
        %s192 = scalar_select %p191, %s21, 1
        %s193 = smul.addr %s192, 4
        %s194 = scalar_lea.vmem %s1, %s193
        %p195 = pneg %p76
        %p196 = pneg %p73
        %s197 = smul.u32 2, %s22
        %p198 = scmp.lt.s32.totalorder %s21, 1
        %s199 = scalar_select %p198, %s21, 1
        %p200 = scmp.lt.s32.totalorder %s197, 1
        %s201 = scalar_select %p200, %s197, 1
        %s202 = smul.addr %s199, 2
        %s203 = sadd.s32 %s201, %s202
        %s204 = smul.addr %s203, 4
        %s205 = scalar_lea.vmem %s2, %s204
        %p206 = pneg %p104
        %p207 = pneg %p101
        %p208 = pneg %p132
        %p209 = pneg %p129
        %s210 = sand.u32 %s119, 1
        %s211 = scalar_lea.sflag [#allocation3], %s210
        %s212 = sand.u32 %s119, 1
        %s213 = smul.addr %s212, 8
        %s214 = scalar_lea.vmem [#allocation2], %s213
        %p215 = scmp.lt.s32.totalorder %s21, 1
        %s216 = scalar_select %p215, %s21, 1
        %s217 = smul.addr %s216, 4
        %s218 = scalar_lea.vmem %s0, %s217
        %p219 = scmp.lt.s32.totalorder %s21, 1
        %s220 = scalar_select %p219, %s21, 1
        %s221 = smul.addr %s220, 4
        %s222 = scalar_lea.vmem %s1, %s221
        %s223 = smul.u32 2, %s22
        %p224 = scmp.lt.s32.totalorder %s21, 1
        %s225 = scalar_select %p224, %s21, 1
        %p226 = scmp.lt.s32.totalorder %s223, 1
        %s227 = scalar_select %p226, %s223, 1
        %s228 = smul.addr %s225, 2
        %s229 = sadd.s32 %s227, %s228
        %s230 = smul.addr %s229, 4
        %s231 = scalar_lea.vmem %s2, %s230
        %s232 = smul.u32 2, %s22
        %s233 = smul.u32 2, %s22
        %v234 = vld [vmem:[%s218] sm:$0xf]
        %v235 = vld [vmem:[%s231] sm:$0xff]
        %237 = vset.pattern.permute.xlu0 0
        %238 = vperm.xlu0 %237, %v234
        %v239 = vpop.permute.xlu0 %238
        %242 = vst [vmem:[#allocation1] ss:$2 sm:$0xff] %v235
        %v243 = vld.sshfl [vmem:[#allocation1] sm:$0xff pattern:$0x75316420]
        %v244 = vld.sshfl [vmem:[#allocation1 + $0x8] sm:$0xff pattern:$0x75316420]
        %v247 = vmul.f32 %v239, %v243
        %v248 = vmul.f32 %v239, %v244
        %v249 = vld [vmem:[%s222] sm:$0xf]
        %251 = vset.pattern.permute.xlu0 0
        %252 = vperm.xlu0 %251, %v249
        %v253 = vpop.permute.xlu0 %252
        %v255 = vadd.f32 %v247, %v253
        %v256 = vadd.f32 %v248, %v253
        %v259 = vrot.slane %v256, 4
        %vm260 = vcmask 1043456
        %v261 = vsel %vm260, %v255, %v259
        %263 = vst [vmem:[%s214] sm:$0xff] %v261
        %s264 = sand.u32 %s119, 1
        %s265 = scalar_lea.sflag [#allocation3], %s264
        %s266 = sand.u32 %s119, 1
        %s267 = smul.addr %s266, 8
        %s268 = scalar_lea.vmem [#allocation2], %s267
        // Predicated region
        $region33: #{tpu_custom_call.1} parent=31 // pred_check
          %p269 = pneg %p129
        $region34: #{tpu_custom_call.1} parent=31 // pred_check_branch
          %271 = sbr.rel (%p269) target = $region36
        $region35: #{tpu_custom_call.1} parent=31 // pred_region
          %s272 = smul.u32 2, %s22
          %274 = vsyncadd %s265, 0
          %s275 = smul.addr %s21, 2
          %s276 = sadd.s32 %s272, %s275
          %s277 = smul.addr %s276, 4
          %s278 = scalar_lea.hbm %s3, %s277
          %s280 = sshll.u32 %s268, 4
          %s281 = int_to_ptr.vmem [resolvable:$true] %s280
          %s282 = sshll.u32 %s278, 4
          %s283 = int_to_ptr.hbm [resolvable:$true] %s282
          %285 = dma.vmem_to_hbm [thread:$0]  %s281, 128, %s283, %s265
        $region36: #{tpu_custom_call.1} parent=31 // pred_fallthru
          _
      $region32: #{tpu_custom_call.1} parent=5 // pred_fallthru
        _
      %p286 = scmp.le.s32.totalorder 2, %s12
      // Predicated region
      $region37: #{tpu_custom_call.1} parent=5 // pred_check
        %p287 = pneg %p286
      $region38: #{tpu_custom_call.1} parent=5 // pred_check_branch
        %289 = sbr.rel (%p287) target = $region40
      $region39: #{tpu_custom_call.1} parent=5 // pred_region
        %s290 = ssub.s32 %s12, 2
        // Predicated region
        $region41: #{tpu_custom_call.1} parent=39 // pred_check
          %p291 = pneg %p135
        $region42: #{tpu_custom_call.1} parent=39 // pred_check_branch
          %293 = sbr.rel (%p291) target = $region44
        $region43: #{tpu_custom_call.1} parent=39 // pred_region
          %s294 = sand.u32 %s120, 1
          %s295 = scalar_lea.sflag [#allocation3], %s294
          %s296 = sand.u32 %s120, 1
          %s297 = smul.addr %s296, 8
          %s298 = scalar_lea.vmem [#allocation2], %s297
          %300 = dma.done %s295, 128
        $region44: #{tpu_custom_call.1} parent=39 // pred_fallthru
          _
      $region40: #{tpu_custom_call.1} parent=5 // pred_fallthru
        _
    $region6: #{tpu_custom_call.1} parent=1 // loop_footer
      %s16 = sadd.s32 1, %s12
    $region7: #{tpu_custom_call.1} parent=1 // loop_footer_branch
      %11 = sbr.rel target = $region3
    $region8: #{tpu_custom_call.1} parent=1 // loop_exit
      _
    %301 = vsyncpa [#allocation3], 1
    %s302 = scalar_lea.sflag [#allocation3], 1
    %303 = vsyncpa %s302, 1

</llo_original>
